<compile_context>
chip_gen: v5e
topology: v5e:2x2
jax: 0.10.0
libtpu: 0.0.40
codegen_flags: <defaults>
</compile_context>

<pallas_src>
import functools
import math

import jax
import jax.numpy as jnp
from jax.experimental import pallas as pl
from jax.experimental.pallas import tpu as pltpu


def _round_up(x, m):
    return ((x + m - 1) // m) * m


# -----------------------------------------------------------------------------
# Kernel: whole MLP fused, one grid axis over batch tiles.
#   refs = (x_ref, w0, b0, w1, b1, ..., w_{L-1}, b_{L-1}, o_ref)
# Weights: compute_dtype [din_p, dout_p]; biases: f32 [1, dout_p].
# Matmuls accumulate in f32 on the MXU; LeakyReLU epilogue runs in f32 and is
# cast back to the weight dtype only to feed the next matmul.
# -----------------------------------------------------------------------------
def _fused_mlp_kernel(*refs, n_layers, negative_slope):
    x_ref = refs[0]
    o_ref = refs[1 + 2 * n_layers]

    h = x_ref[...]  # (tm, Din)
    for i in range(n_layers):
        w_ref = refs[1 + 2 * i]  # (Din_i, Dout_p_i)
        b_ref = refs[2 + 2 * i]  # (1, Dout_p_i) f32
        acc = jnp.dot(h, w_ref[...], preferred_element_type=jnp.float32)
        acc = acc + b_ref[...]                      # f32 bias, broadcast
        if i < n_layers - 1:
            acc = jnp.where(acc >= 0, acc, negative_slope * acc)  # LeakyReLU
            h = acc.astype(w_ref.dtype)             # back to MXU operand dtype
        else:
            h = acc                                  # final layer: Identity
    o_ref[...] = h.astype(o_ref.dtype)


# -----------------------------------------------------------------------------
# One-time parameter preparation (hoisted out of the per-call path).
# -----------------------------------------------------------------------------
def prepare_mlp_params(params, *, lane_mult=128, compute_dtype=jnp.bfloat16):
    """Pad/cast params once.

    params: list of (w, b) with w: (din, dout), b: (dout,) or (1, dout).
    Weights -> compute_dtype, zero-padded; biases -> f32, zero-padded.
    Input dim is left unpadded (block dim == full array dim is legal; zero-K
    padding would only add useless MXU work).
    """
    dims = [params[0][0].shape[0]] + [w.shape[1] for (w, _) in params]
    dims_p = [dims[0]] + [_round_up(d, lane_mult) for d in dims[1:]]

    layers = []
    for li, (w, b) in enumerate(params):
        din, dout = w.shape
        din_p, dout_p = dims_p[li], dims_p[li + 1]
        w_p = jnp.pad(w.astype(compute_dtype),
                      ((0, din_p - din), (0, dout_p - dout)))
        b2 = jnp.reshape(b, (1, -1)).astype(jnp.float32)
        b_p = jnp.pad(b2, ((0, 0), (0, dout_p - dout)))
        layers.append((w_p, b_p))

    return {
        "layers": layers,
        "dims": dims,
        "dims_padded": dims_p,
        "output_dim": dims[-1],
        "compute_dtype": jnp.dtype(compute_dtype),
    }


# -----------------------------------------------------------------------------
# Forward pass.
# -----------------------------------------------------------------------------
def mlp_forward_fused(x, prepared, *, negative_slope=0.01, out_dtype=None,
                      max_batch_tile=512):
    layers = prepared["layers"]
    dims_p = prepared["dims_padded"]
    out_dim = prepared["output_dim"]
    compute_dtype = prepared["compute_dtype"]
    n_layers = len(layers)

    B, input_dim = x.shape
    assert input_dim == prepared["dims"][0], "input_dim mismatch"
    out_dtype = jnp.dtype(out_dtype if out_dtype is not None else x.dtype)

    # --- batch tile selection -------------------------------------------------
    # multiple of 16 for bf16 sublane packing (8 for f32); >= 2 grid steps for
    # large batches so v7x's two TensorCores both get work; shrink if the VMEM
    # budget would be exceeded.
    sub = 16 if compute_dtype.itemsize < 4 else 8
    if B <= 256:
        tm = _round_up(B, sub)                      # single step; weight-bound
    else:
        tm = min(max_batch_tile, _round_up(-(-B // 2), sub))

    def vmem_bytes(tm_):
        w_bytes = sum(w.size * w.dtype.itemsize + b.size * b.dtype.itemsize
                      for (w, b) in layers)          # single-buffered
        x_bytes = 2 * tm_ * dims_p[0] * compute_dtype.itemsize   # double buf
        o_bytes = 2 * tm_ * dims_p[-1] * out_dtype.itemsize      # double buf
        inter = 2 * tm_ * max(dims_p[1:]) * 4                    # f32 temps
        return w_bytes + x_bytes + o_bytes + inter

    VMEM_BUDGET = 48 << 20          # headroom under v7x's 64 MiB physical VMEM
    while tm > sub and vmem_bytes(tm) > VMEM_BUDGET:
        tm = _round_up(tm // 2, sub)

    B_pad = _round_up(B, tm)
    grid = (B_pad // tm,)

    # --- pad x: fused pad+cast, batch dim only ---------------------------------
    x_p = jnp.pad(x.astype(compute_dtype), ((0, B_pad - B), (0, 0)))

    # --- block specs ------------------------------------------------------------
    in_specs = [pl.BlockSpec((tm, dims_p[0]), lambda i: (i, 0))]
    for li in range(n_layers):
        din_p, dout_p = dims_p[li], dims_p[li + 1]
        # Grid-invariant weights/biases: single buffer (halves their VMEM).
        in_specs.append(pl.BlockSpec((din_p, dout_p), lambda i: (0, 0),
                                     pipeline_mode=pl.Buffered(1)))
        in_specs.append(pl.BlockSpec((1, dout_p), lambda i: (0, 0),
                                     pipeline_mode=pl.Buffered(1)))
    out_specs = pl.BlockSpec((tm, dims_p[-1]), lambda i: (i, 0))

    # --- advisory cost estimate ---------------------------------------------------
    flops = 2 * B_pad * sum(dims_p[i] * dims_p[i + 1] for i in range(n_layers))
    bytes_accessed = int(
        x_p.size * x_p.dtype.itemsize
        + sum(w.size * w.dtype.itemsize + b.size * b.dtype.itemsize
              for (w, b) in layers)
        + B_pad * dims_p[-1] * out_dtype.itemsize)
    cost = pl.CostEstimate(flops=flops, transcendentals=0,
                           bytes_accessed=bytes_accessed)

    vmem_limit = int(min(max(int(vmem_bytes(tm) * 1.5), 4 << 20), 64 << 20))

    kernel = functools.partial(_fused_mlp_kernel, n_layers=n_layers,
                               negative_slope=negative_slope)

    flat_inputs = [x_p]
    for (w_p, b_p) in layers:
        flat_inputs.extend([w_p, b_p])

    out_p = pl.pallas_call(
        kernel,
        out_shape=jax.ShapeDtypeStruct((B_pad, dims_p[-1]), out_dtype),
        grid=grid,
        in_specs=in_specs,
        out_specs=out_specs,
        compiler_params=pltpu.CompilerParams(
            dimension_semantics=("parallel",),      # batch axis -> 2 TCs on v7x
            vmem_limit_bytes=vmem_limit,
        ),
        cost_estimate=cost,
    )(*flat_inputs)

    return out_p[:B, :out_dim]


# -----------------------------------------------------------------------------
# Init + reference (matches the PyTorch module: xavier_uniform_, bias=0.01).
# -----------------------------------------------------------------------------
def init_mlp_params(key, input_dim, hidden_dims, output_dim, dtype=jnp.float32):
    dims = [input_dim] + list(hidden_dims) + [output_dim]
    params = []
    for i in range(len(dims) - 1):
        key, sub = jax.random.split(key)
        fan_in, fan_out = dims[i], dims[i + 1]
        bound = math.sqrt(6.0 / (fan_in + fan_out))
        w = jax.random.uniform(
            sub, (fan_in, fan_out), minval=-bound, maxval=bound, dtype=dtype)
        b = jnp.full((1, fan_out), 0.01, dtype=dtype)
        params.append((w, b))
    return params


def _reference_forward(x, params, negative_slope=0.01):
    h = x
    for i, (w, b) in enumerate(params):
        h = h @ w + b
        if i < len(params) - 1:
            h = jnp.where(h >= 0, h, negative_slope * h)
    return h


if __name__ == "__main__":
    # Small shapes consistent with the module: batch=8, input_dim=32,
    # hidden_dims=[64, 64], output_dim=16.
    batch = 8
    input_dim = 32
    hidden_dims = [64, 64]
    output_dim = 16

    key = jax.random.PRNGKey(0)
    key, xkey = jax.random.split(key)
    x = jax.random.normal(xkey, (batch, input_dim), dtype=jnp.float32)
    params = init_mlp_params(key, input_dim, hidden_dims, output_dim)

    ref = _reference_forward(x, params)

    # f32 operand path: exact up to accumulation-order noise.
    prep_f32 = prepare_mlp_params(params, compute_dtype=jnp.float32)
    out_f32 = mlp_forward_fused(x, prep_f32)
    jax.block_until_ready(out_f32)
    assert out_f32.shape == (batch, output_dim)
    assert jnp.allclose(out_f32, ref, atol=1e-4, rtol=1e-4), "f32 path mismatch"

    # bf16 operand path (MXU-native) with f32 accumulation / f32 biases.
    prep_bf16 = prepare_mlp_params(params, compute_dtype=jnp.bfloat16)
    out_bf16 = mlp_forward_fused(x, prep_bf16)
    jax.block_until_ready(out_bf16)
    assert out_bf16.shape == (batch, output_dim)
    assert jnp.allclose(out_bf16, ref, atol=5e-2, rtol=5e-2), "bf16 path mismatch"

    print("KERNEL_OK")
</pallas_src>

<mosaic_0001>
module attributes {stable_mosaic.version = 11 : i64} {
  func.func @_fused_mlp_kernel(%arg0: i32, %arg1: memref<8x32xf32, #tpu.memory_space<vmem>>, %arg2: memref<32x128xf32, #tpu.memory_space<vmem>>, %arg3: memref<1x128xf32, #tpu.memory_space<vmem>>, %arg4: memref<128x128xf32, #tpu.memory_space<vmem>>, %arg5: memref<1x128xf32, #tpu.memory_space<vmem>>, %arg6: memref<128x128xf32, #tpu.memory_space<vmem>>, %arg7: memref<1x128xf32, #tpu.memory_space<vmem>>, %arg8: memref<8x128xf32, #tpu.memory_space<vmem>>) attributes {dimension_semantics = [#tpu.dimension_semantics<parallel>], iteration_bounds = array<i64: 1>, scalar_prefetch = 0 : i64, scratch_operands = 0 : i64, tpu.core_type = #tpu.core_type<tc>, window_params = [{transform_indices = @transform_0, window_bounds = array<i64: 8, 32>}, {pipeline_mode = #tpu.pipeline_mode<synchronous>, transform_indices = @transform_1, window_bounds = array<i64: 32, 128>}, {pipeline_mode = #tpu.pipeline_mode<synchronous>, transform_indices = @transform_2, window_bounds = array<i64: 1, 128>}, {pipeline_mode = #tpu.pipeline_mode<synchronous>, transform_indices = @transform_3, window_bounds = array<i64: 128, 128>}, {pipeline_mode = #tpu.pipeline_mode<synchronous>, transform_indices = @transform_4, window_bounds = array<i64: 1, 128>}, {pipeline_mode = #tpu.pipeline_mode<synchronous>, transform_indices = @transform_5, window_bounds = array<i64: 128, 128>}, {pipeline_mode = #tpu.pipeline_mode<synchronous>, transform_indices = @transform_6, window_bounds = array<i64: 1, 128>}, {transform_indices = @transform_7, window_bounds = array<i64: 8, 128>}]} {
    %c0 = arith.constant 0 : index
    %c0_0 = arith.constant 0 : index
    %0 = vector.load %arg1[%c0, %c0_0] : memref<8x32xf32, #tpu.memory_space<vmem>>, vector<8x32xf32>
    %c0_1 = arith.constant 0 : index
    %c0_2 = arith.constant 0 : index
    %1 = vector.load %arg2[%c0_1, %c0_2] : memref<32x128xf32, #tpu.memory_space<vmem>>, vector<32x128xf32>
    %cst = arith.constant dense<0.000000e+00> : vector<8x128xf32>
    %2 = tpu.matmul %0, %1, %cst {dimension_numbers = #tpu.dot_dimension_numbers<[1], [0], [0], [1], [0, 0, 1, 1], [], []>} : vector<8x32xf32>, vector<32x128xf32>, vector<8x128xf32> -> vector<8x128xf32>
    %c0_3 = arith.constant 0 : index
    %c0_4 = arith.constant 0 : index
    %3 = vector.load %arg3[%c0_3, %c0_4] : memref<1x128xf32, #tpu.memory_space<vmem>>, vector<1x128xf32>
    %4 = vector.broadcast %3 : vector<1x128xf32> to vector<8x128xf32>
    %5 = arith.addf %2, %4 : vector<8x128xf32>
    %cst_5 = arith.constant 0.000000e+00 : f32
    %6 = vector.broadcast %cst_5 : f32 to vector<8x128xf32>
    %7 = arith.cmpf oge, %5, %6 : vector<8x128xf32>
    %cst_6 = arith.constant 0.00999999977 : f32
    %8 = vector.broadcast %cst_6 : f32 to vector<8x128xf32>
    %9 = arith.mulf %8, %5 : vector<8x128xf32>
    %10 = arith.select %7, %5, %9 : vector<8x128xi1>, vector<8x128xf32>
    %c0_7 = arith.constant 0 : index
    %c0_8 = arith.constant 0 : index
    %11 = vector.load %arg4[%c0_7, %c0_8] : memref<128x128xf32, #tpu.memory_space<vmem>>, vector<128x128xf32>
    %cst_9 = arith.constant dense<0.000000e+00> : vector<8x128xf32>
    %12 = tpu.matmul %10, %11, %cst_9 {dimension_numbers = #tpu.dot_dimension_numbers<[1], [0], [0], [1], [0, 0, 1, 1], [], []>} : vector<8x128xf32>, vector<128x128xf32>, vector<8x128xf32> -> vector<8x128xf32>
    %c0_10 = arith.constant 0 : index
    %c0_11 = arith.constant 0 : index
    %13 = vector.load %arg5[%c0_10, %c0_11] : memref<1x128xf32, #tpu.memory_space<vmem>>, vector<1x128xf32>
    %14 = vector.broadcast %13 : vector<1x128xf32> to vector<8x128xf32>
    %15 = arith.addf %12, %14 : vector<8x128xf32>
    %cst_12 = arith.constant 0.000000e+00 : f32
    %16 = vector.broadcast %cst_12 : f32 to vector<8x128xf32>
    %17 = arith.cmpf oge, %15, %16 : vector<8x128xf32>
    %cst_13 = arith.constant 0.00999999977 : f32
    %18 = vector.broadcast %cst_13 : f32 to vector<8x128xf32>
    %19 = arith.mulf %18, %15 : vector<8x128xf32>
    %20 = arith.select %17, %15, %19 : vector<8x128xi1>, vector<8x128xf32>
    %c0_14 = arith.constant 0 : index
    %c0_15 = arith.constant 0 : index
    %21 = vector.load %arg6[%c0_14, %c0_15] : memref<128x128xf32, #tpu.memory_space<vmem>>, vector<128x128xf32>
    %cst_16 = arith.constant dense<0.000000e+00> : vector<8x128xf32>
    %22 = tpu.matmul %20, %21, %cst_16 {dimension_numbers = #tpu.dot_dimension_numbers<[1], [0], [0], [1], [0, 0, 1, 1], [], []>} : vector<8x128xf32>, vector<128x128xf32>, vector<8x128xf32> -> vector<8x128xf32>
    %c0_17 = arith.constant 0 : index
    %c0_18 = arith.constant 0 : index
    %23 = vector.load %arg7[%c0_17, %c0_18] : memref<1x128xf32, #tpu.memory_space<vmem>>, vector<1x128xf32>
    %24 = vector.broadcast %23 : vector<1x128xf32> to vector<8x128xf32>
    %25 = arith.addf %22, %24 : vector<8x128xf32>
    %c0_19 = arith.constant 0 : index
    %c0_20 = arith.constant 0 : index
    %26 = vector.load %arg8[%c0_19, %c0_20] : memref<8x128xf32, #tpu.memory_space<vmem>>, vector<8x128xf32>
    tpu.vector_store %arg8[%c0_19, %c0_20], %25 {strides = array<i32>} : memref<8x128xf32, #tpu.memory_space<vmem>>, vector<8x128xf32>,
    return
  }
  func.func @transform_0(%arg0: i32) -> (i32, i32) {
    %c0_i32 = arith.constant 0 : i32
    %c0_i32_0 = arith.constant 0 : i32
    return %arg0, %c0_i32 : i32, i32
  }
  func.func @transform_1(%arg0: i32) -> (i32, i32) {
    %c0_i32 = arith.constant 0 : i32
    %c0_i32_0 = arith.constant 0 : i32
    %c0_i32_1 = arith.constant 0 : i32
    return %c0_i32, %c0_i32_0 : i32, i32
  }
  func.func @transform_2(%arg0: i32) -> (i32, i32) {
    %c0_i32 = arith.constant 0 : i32
    %c0_i32_0 = arith.constant 0 : i32
    %c0_i32_1 = arith.constant 0 : i32
    return %c0_i32, %c0_i32_0 : i32, i32
  }
  func.func @transform_3(%arg0: i32) -> (i32, i32) {
    %c0_i32 = arith.constant 0 : i32
    %c0_i32_0 = arith.constant 0 : i32
    %c0_i32_1 = arith.constant 0 : i32
    return %c0_i32, %c0_i32_0 : i32, i32
  }
  func.func @transform_4(%arg0: i32) -> (i32, i32) {
    %c0_i32 = arith.constant 0 : i32
    %c0_i32_0 = arith.constant 0 : i32
    %c0_i32_1 = arith.constant 0 : i32
    return %c0_i32, %c0_i32_0 : i32, i32
  }
  func.func @transform_5(%arg0: i32) -> (i32, i32) {
    %c0_i32 = arith.constant 0 : i32
    %c0_i32_0 = arith.constant 0 : i32
    %c0_i32_1 = arith.constant 0 : i32
    return %c0_i32, %c0_i32_0 : i32, i32
  }
  func.func @transform_6(%arg0: i32) -> (i32, i32) {
    %c0_i32 = arith.constant 0 : i32
    %c0_i32_0 = arith.constant 0 : i32
    %c0_i32_1 = arith.constant 0 : i32
    return %c0_i32, %c0_i32_0 : i32, i32
  }
  func.func @transform_7(%arg0: i32) -> (i32, i32) {
    %c0_i32 = arith.constant 0 : i32
    %c0_i32_0 = arith.constant 0 : i32
    return %arg0, %c0_i32 : i32, i32
  }
}

</mosaic_0001>

<llo_original>
// kernel: tpu_custom_call.1
$region0: #{tpu_custom_call.1}
  #allocation0 [shape = 'u32[]', space=smem, size = 0x4, offset = 0x4, fixed_abs, tag = 'smem constant byte address 0x4 - core index']
  #allocation1 [shape = 'u32[72,128]{1,0:T(1,128)}', space=vmem, size = 0x9000, scoped, tag = 'internal scratch']
  %s0 = inlined_call_operand.hbm [shape: f32[8,32], index: 0, kind: input, shape index: {}]
  %s1 = inlined_call_operand.hbm [shape: f32[32,128], index: 1, kind: input, shape index: {}]
  %s2 = inlined_call_operand.vmem [shape: f32[1,128], index: 2, kind: input, shape index: {}]
  %s3 = inlined_call_operand.hbm [shape: f32[128,128], index: 3, kind: input, shape index: {}]
  %s4 = inlined_call_operand.vmem [shape: f32[1,128], index: 4, kind: input, shape index: {}]
  %s5 = inlined_call_operand.hbm [shape: f32[128,128], index: 5, kind: input, shape index: {}]
  %s6 = inlined_call_operand.vmem [shape: f32[1,128], index: 6, kind: input, shape index: {}]
  %s7 = inlined_call_operand.hbm [shape: f32[8,128], index: 7, kind: output, shape index: {}]
  %s8 = sld [smem:[#allocation0]]
  $region54: #{tpu_custom_call.1} parent=0
    _
  %s10 = ssub.s32 1, %s8
  %s11 = scalar_select 0, %s10, %s8
  $region1: #{tpu_custom_call.1} parent=0
    #allocation2 [shape = 'u8[4096]{0}', space=vmem, size = 0x1000, scoped, tag = 'input window, operand 0, single buffered']
    #allocation3 [shape = 's32[1]{0}', space=sflag, size = 0x4, scoped, tag = 'scoped memory for tpu_custom_call.1']
    #allocation4 [shape = 's32[1]{0}', space=sflag, size = 0x4, scoped, tag = 'scoped memory for tpu_custom_call.1']
    #allocation5 [shape = 'u8[16384]{0}', space=vmem, size = 0x4000, scoped, tag = 'input window, operand 1, single buffered']
    #allocation6 [shape = 's32[1]{0}', space=sflag, size = 0x4, scoped, tag = 'scoped memory for tpu_custom_call.1']
    #allocation7 [shape = 'u8[65536]{0}', space=vmem, size = 0x10000, scoped, tag = 'input window, operand 3, single buffered']
    #allocation8 [shape = 'u8[65536]{0}', space=vmem, size = 0x10000, scoped, tag = 'input window, operand 5, single buffered']
    #allocation9 [shape = 's32[1]{0}', space=sflag, size = 0x4, scoped, tag = 'scoped memory for tpu_custom_call.1']
    #allocation10 [shape = 'u8[4096]{0}', space=vmem, size = 0x1000, scoped, tag = 'output window, operand 0, single buffered']
    %12 = vsyncpa [#allocation3], 0
    %13 = vsyncpa [#allocation6], 0
    %14 = vsyncpa [#allocation9], 0
    %15 = vsyncpa [#allocation4], 0
    // Predicated region
    $region2: #{tpu_custom_call.1} parent=1 // pred_check
      _
    $region3: #{tpu_custom_call.1} parent=1 // pred_check_branch
      %17 = sbr.rel (0) target = $region5
    $region4: #{tpu_custom_call.1} parent=1 // pred_region
      %19 = vsyncadd [#allocation3], 0
      %s21 = sshll.u32 %s0, 4
      %s22 = int_to_ptr.hbm [resolvable:$true] %s21
      %s23 = sshll.u32 [#allocation2], 4
      %s24 = int_to_ptr.vmem [resolvable:$true] %s23
      %26 = dma.hbm_to_vmem [thread:$0]  %s22, 128, %s24, [#allocation3]
    $region5: #{tpu_custom_call.1} parent=1 // pred_fallthru
      _
    // Predicated region
    $region6: #{tpu_custom_call.1} parent=1 // pred_check
      _
    $region7: #{tpu_custom_call.1} parent=1 // pred_check_branch
      %28 = sbr.rel (0) target = $region9
    $region8: #{tpu_custom_call.1} parent=1 // pred_region
      %30 = vsyncadd [#allocation6], 0
      %s31 = sshll.u32 %s1, 4
      %s32 = int_to_ptr.hbm [resolvable:$true] %s31
      %s33 = sshll.u32 [#allocation5], 4
      %s34 = int_to_ptr.vmem [resolvable:$true] %s33
      %39 = dma.hbm_to_vmem [thread:$0]  %s32, 512, %s34, [#allocation6], 128, 128, 8
    $region9: #{tpu_custom_call.1} parent=1 // pred_fallthru
      _
    // Predicated region
    $region10: #{tpu_custom_call.1} parent=1 // pred_check
      _
    $region11: #{tpu_custom_call.1} parent=1 // pred_check_branch
      %41 = sbr.rel (0) target = $region13
    $region12: #{tpu_custom_call.1} parent=1 // pred_region
      _
    $region13: #{tpu_custom_call.1} parent=1 // pred_fallthru
      _
    // Predicated region
    $region14: #{tpu_custom_call.1} parent=1 // pred_check
      _
    $region15: #{tpu_custom_call.1} parent=1 // pred_check_branch
      %43 = sbr.rel (0) target = $region17
    $region16: #{tpu_custom_call.1} parent=1 // pred_region
      %45 = vsyncadd [#allocation6], 0
      %s46 = sshll.u32 %s3, 4
      %s47 = int_to_ptr.hbm [resolvable:$true] %s46
      %s48 = sshll.u32 [#allocation7], 4
      %s49 = int_to_ptr.vmem [resolvable:$true] %s48
      %54 = dma.hbm_to_vmem [thread:$0]  %s47, 2048, %s49, [#allocation6], 128, 128, 8
    $region17: #{tpu_custom_call.1} parent=1 // pred_fallthru
      _
    // Predicated region
    $region18: #{tpu_custom_call.1} parent=1 // pred_check
      _
    $region19: #{tpu_custom_call.1} parent=1 // pred_check_branch
      %56 = sbr.rel (0) target = $region21
    $region20: #{tpu_custom_call.1} parent=1 // pred_region
      _
    $region21: #{tpu_custom_call.1} parent=1 // pred_fallthru
      _
    // Predicated region
    $region22: #{tpu_custom_call.1} parent=1 // pred_check
      _
    $region23: #{tpu_custom_call.1} parent=1 // pred_check_branch
      %58 = sbr.rel (0) target = $region25
    $region24: #{tpu_custom_call.1} parent=1 // pred_region
      %60 = vsyncadd [#allocation9], 0
      %s61 = sshll.u32 %s5, 4
      %s62 = int_to_ptr.hbm [resolvable:$true] %s61
      %s63 = sshll.u32 [#allocation8], 4
      %s64 = int_to_ptr.vmem [resolvable:$true] %s63
      %69 = dma.hbm_to_vmem [thread:$0]  %s62, 2048, %s64, [#allocation9], 128, 128, 8
    $region25: #{tpu_custom_call.1} parent=1 // pred_fallthru
      _
    // Predicated region
    $region26: #{tpu_custom_call.1} parent=1 // pred_check
      _
    $region27: #{tpu_custom_call.1} parent=1 // pred_check_branch
      %71 = sbr.rel (0) target = $region29
    $region28: #{tpu_custom_call.1} parent=1 // pred_region
      _
    $region29: #{tpu_custom_call.1} parent=1 // pred_fallthru
      _
    // Predicated region
    $region30: #{tpu_custom_call.1} parent=1 // pred_check
      _
    $region31: #{tpu_custom_call.1} parent=1 // pred_check_branch
      %73 = sbr.rel (0) target = $region33
    $region32: #{tpu_custom_call.1} parent=1 // pred_region
      %75 = dma.done [#allocation3], 128
    $region33: #{tpu_custom_call.1} parent=1 // pred_fallthru
      _
    // Predicated region
    $region34: #{tpu_custom_call.1} parent=1 // pred_check
      _
    $region35: #{tpu_custom_call.1} parent=1 // pred_check_branch
      %77 = sbr.rel (0) target = $region37
    $region36: #{tpu_custom_call.1} parent=1 // pred_region
      %79 = dma.done [#allocation6], 512
    $region37: #{tpu_custom_call.1} parent=1 // pred_fallthru
      _
    // Predicated region
    $region38: #{tpu_custom_call.1} parent=1 // pred_check
      _
    $region39: #{tpu_custom_call.1} parent=1 // pred_check_branch
      %81 = sbr.rel (0) target = $region41
    $region40: #{tpu_custom_call.1} parent=1 // pred_region
      %83 = dma.done [#allocation6], 2048
    $region41: #{tpu_custom_call.1} parent=1 // pred_fallthru
      _
    // Predicated region
    $region42: #{tpu_custom_call.1} parent=1 // pred_check
      _
    $region43: #{tpu_custom_call.1} parent=1 // pred_check_branch
      %85 = sbr.rel (0) target = $region45
    $region44: #{tpu_custom_call.1} parent=1 // pred_region
      %87 = dma.done [#allocation9], 2048
    $region45: #{tpu_custom_call.1} parent=1 // pred_fallthru
      _
    %v88 = vld [vmem:[#allocation2] sm:$0xff]
    %v89 = vld [vmem:[#allocation5] sm:$0xff]
    %v90 = vld [vmem:[#allocation5 + $0x8] sm:$0xff]
    %v91 = vld [vmem:[#allocation5 + $0x10] sm:$0xff]
    %v92 = vld [vmem:[#allocation5 + $0x18] sm:$0xff]
    %v93 = vld [vmem:[%s2] sm:$0x1]
    %v95 = vperm.slane %v93, 0
    %vm97 = vcmask 261120
    %v99 = vsel %vm97, %v88, 0
    %101 = vmatpush.msra.mxu0 0.0
    %102 = vmatpush.msra.mxu0 0.0
    %103 = vmatpush.msra.mxu0 0.0
    %104 = vmatpush.msra.mxu0 0.0
    %105 = vmatpush.msra.mxu0 0.0
    %106 = vmatpush.msra.mxu0 0.0
    %107 = vmatpush.msra.mxu0 0.0
    %108 = vmatpush.msra.mxu0 0.0
    %109 = vmatpush.msra.mxu0 0.0
    %110 = vmatpush.msra.mxu0 0.0
    %111 = vmatpush.msra.mxu0 0.0
    %112 = vmatpush.msra.mxu0 0.0
    %113 = vmatpush.msra.mxu0 %v92
    %114 = vmatpush.msra.mxu0 %v91
    %115 = vmatpush.msra.mxu0 %v90
    %116 = vmatpush.msra.mxu0 %v89
    %117 = vmatmul.f32.gmra.mxu0 %v99
    %v118 = vpop.f32.mrf.mxu0
    %v119 = vadd.f32 %v95, %v118
    %120 = vdwg.mxu0
    %vm121 = vcmp.ge.f32.partialorder %v119, 0.0
    %v122 = vmul.f32 %v119, 0.01
    %v123 = vsel %vm121, %v119, %v122
    %v124 = vld [vmem:[#allocation7] sm:$0xff]
    %v125 = vld [vmem:[#allocation7 + $0x8] sm:$0xff]
    %v126 = vld [vmem:[#allocation7 + $0x10] sm:$0xff]
    %v127 = vld [vmem:[#allocation7 + $0x18] sm:$0xff]
    %v128 = vld [vmem:[#allocation7 + $0x20] sm:$0xff]
    %v129 = vld [vmem:[#allocation7 + $0x28] sm:$0xff]
    %v130 = vld [vmem:[#allocation7 + $0x30] sm:$0xff]
    %v131 = vld [vmem:[#allocation7 + $0x38] sm:$0xff]
    %v132 = vld [vmem:[#allocation7 + $0x40] sm:$0xff]
    %v133 = vld [vmem:[#allocation7 + $0x48] sm:$0xff]
    %v134 = vld [vmem:[#allocation7 + $0x50] sm:$0xff]
    %v135 = vld [vmem:[#allocation7 + $0x58] sm:$0xff]
    %v136 = vld [vmem:[#allocation7 + $0x60] sm:$0xff]
    %v137 = vld [vmem:[#allocation7 + $0x68] sm:$0xff]
    %v138 = vld [vmem:[#allocation7 + $0x70] sm:$0xff]
    %v139 = vld [vmem:[#allocation7 + $0x78] sm:$0xff]
    %v140 = vld [vmem:[%s4] sm:$0x1]
    %v142 = vperm.slane %v140, 0
    %144 = vmatpush.msra.mxu0 %v139
    %145 = vmatpush.msra.mxu0 %v138
    %146 = vmatpush.msra.mxu0 %v137
    %147 = vmatpush.msra.mxu0 %v136
    %148 = vmatpush.msra.mxu0 %v135
    %149 = vmatpush.msra.mxu0 %v134
    %150 = vmatpush.msra.mxu0 %v133
    %151 = vmatpush.msra.mxu0 %v132
    %152 = vmatpush.msra.mxu0 %v131
    %153 = vmatpush.msra.mxu0 %v130
    %154 = vmatpush.msra.mxu0 %v129
    %155 = vmatpush.msra.mxu0 %v128
    %156 = vmatpush.msra.mxu0 %v127
    %157 = vmatpush.msra.mxu0 %v126
    %158 = vmatpush.msra.mxu0 %v125
    %159 = vmatpush.msra.mxu0 %v124
    %160 = vmatmul.f32.gmra.mxu0 %v123
    %v161 = vpop.f32.mrf.mxu0
    %v162 = vadd.f32 %v142, %v161
    %163 = vdwg.mxu0
    %vm164 = vcmp.ge.f32.partialorder %v162, 0.0
    %v165 = vmul.f32 %v162, 0.01
    %v166 = vsel %vm164, %v162, %v165
    %v167 = vld [vmem:[#allocation8] sm:$0xff]
    %v168 = vld [vmem:[#allocation8 + $0x8] sm:$0xff]
    %v169 = vld [vmem:[#allocation8 + $0x10] sm:$0xff]
    %v170 = vld [vmem:[#allocation8 + $0x18] sm:$0xff]
    %v171 = vld [vmem:[#allocation8 + $0x20] sm:$0xff]
    %v172 = vld [vmem:[#allocation8 + $0x28] sm:$0xff]
    %v173 = vld [vmem:[#allocation8 + $0x30] sm:$0xff]
    %v174 = vld [vmem:[#allocation8 + $0x38] sm:$0xff]
    %v175 = vld [vmem:[#allocation8 + $0x40] sm:$0xff]
    %v176 = vld [vmem:[#allocation8 + $0x48] sm:$0xff]
    %v177 = vld [vmem:[#allocation8 + $0x50] sm:$0xff]
    %v178 = vld [vmem:[#allocation8 + $0x58] sm:$0xff]
    %v179 = vld [vmem:[#allocation8 + $0x60] sm:$0xff]
    %v180 = vld [vmem:[#allocation8 + $0x68] sm:$0xff]
    %v181 = vld [vmem:[#allocation8 + $0x70] sm:$0xff]
    %v182 = vld [vmem:[#allocation8 + $0x78] sm:$0xff]
    %v183 = vld [vmem:[%s6] sm:$0x1]
    %v185 = vperm.slane %v183, 0
    %187 = vmatpush.msra.mxu0 %v182
    %188 = vmatpush.msra.mxu0 %v181
    %189 = vmatpush.msra.mxu0 %v180
    %190 = vmatpush.msra.mxu0 %v179
    %191 = vmatpush.msra.mxu0 %v178
    %192 = vmatpush.msra.mxu0 %v177
    %193 = vmatpush.msra.mxu0 %v176
    %194 = vmatpush.msra.mxu0 %v175
    %195 = vmatpush.msra.mxu0 %v174
    %196 = vmatpush.msra.mxu0 %v173
    %197 = vmatpush.msra.mxu0 %v172
    %198 = vmatpush.msra.mxu0 %v171
    %199 = vmatpush.msra.mxu0 %v170
    %200 = vmatpush.msra.mxu0 %v169
    %201 = vmatpush.msra.mxu0 %v168
    %202 = vmatpush.msra.mxu0 %v167
    %203 = vmatmul.f32.gmra.mxu0 %v166
    %v204 = vpop.f32.mrf.mxu0
    %v205 = vadd.f32 %v185, %v204
    %206 = vdwg.mxu0
    %207 = vst [vmem:[#allocation10] sm:$0xff] %v205
    // Predicated region
    $region46: #{tpu_custom_call.1} parent=1 // pred_check
      _
    $region47: #{tpu_custom_call.1} parent=1 // pred_check_branch
      %209 = sbr.rel (0) target = $region49
    $region48: #{tpu_custom_call.1} parent=1 // pred_region
      %211 = vsyncadd [#allocation4], 0
      %s213 = sshll.u32 [#allocation10], 4
      %s214 = int_to_ptr.vmem [resolvable:$true] %s213
      %s215 = sshll.u32 %s7, 4
      %s216 = int_to_ptr.hbm [resolvable:$true] %s215
      %218 = dma.vmem_to_hbm [thread:$0]  %s214, 128, %s216, [#allocation4]
    $region49: #{tpu_custom_call.1} parent=1 // pred_fallthru
      _
    // Predicated region
    $region50: #{tpu_custom_call.1} parent=1 // pred_check
      _
    $region51: #{tpu_custom_call.1} parent=1 // pred_check_branch
      %220 = sbr.rel (0) target = $region53
    $region52: #{tpu_custom_call.1} parent=1 // pred_region
      %222 = dma.done [#allocation4], 128
    $region53: #{tpu_custom_call.1} parent=1 // pred_fallthru
      _
    %223 = vsyncpa [#allocation3], 1
    %224 = vsyncpa [#allocation6], 1
    %225 = vsyncpa [#allocation9], 1
    %226 = vsyncpa [#allocation4], 1

</llo_original>
